<compile_context>
chip_gen: v5e
topology: v5e:2x2
jax: 0.10.0
libtpu: 0.0.40
codegen_flags: <defaults>
</compile_context>

<pallas_src>
import math
import functools

import jax
import jax.numpy as jnp
from jax import lax
from jax.experimental import pallas as pl
from jax.experimental.pallas import tpu as pltpu

# Large finite negative instead of -inf: behaves identically through exp()
# but cannot produce NaN via (-inf) - (-inf).
_MASK_VALUE = -0.7 * float(jnp.finfo(jnp.float32).max)


def _round_up(x, m):
    return -(-x // m) * m


def _pick_tile(s, preferred=(512, 256, 128)):
    """Largest preferred tile that evenly divides s, else the full extent."""
    for t in preferred:
        if t <= s and s % t == 0:
            return t
    return s


def _padded_bytes(shape, itemsize):
    """VMEM footprint estimate including (sublane, lane) tile padding."""
    s = list(shape)
    s[-1] = _round_up(s[-1], 128)
    if len(s) >= 2:
        s[-2] = _round_up(s[-2], max(8, 32 // itemsize))
    n = 1
    for d in s:
        n *= d
    return n * itemsize


def _auto_vmem_limit():
    """Per-generation scoped-VMEM budget (v5e/v6e: 128 MiB phys; v7x: 64 MiB)."""
    default = 48 * 1024 * 1024
    try:
        cap = int(pltpu.get_tpu_info().vmem_capacity_bytes)
    except Exception:
        return default
    if cap >= 96 * 1024 * 1024:                          # v5e / v6e class
        return min(100 * 1024 * 1024, cap - 16 * 1024 * 1024)
    # v7x class: leave headroom for Mosaic internal scratch.
    return max(32 * 1024 * 1024, min(52 * 1024 * 1024, int(cap * 0.8)))


def _const_spec(block_shape, grid_rank):
    """BlockSpec for a grid-invariant (weight/bias) operand, single-buffered."""
    zeros = (0,) * len(block_shape)
    if grid_rank == 2:
        index_map = lambda i, j: zeros
    elif grid_rank == 3:
        index_map = lambda i, j, k: zeros
    else:
        index_map = lambda *idx: zeros
    try:
        # Constant-index blocks don't need a double buffer -> reclaim VMEM
        # (matters most against v7x's 64 MiB VMEM).
        return pl.BlockSpec(block_shape, index_map,
                            pipeline_mode=pl.Buffered(1))
    except Exception:   # pipeline_mode/Buffered unavailable on this jax build
        return pl.BlockSpec(block_shape, index_map)


def _kv_resident_fits(S, D, n_heads, dh, tq, mm_isz, out_isz, vmem_limit):
    """Rough pass-2 VMEM estimate to decide if K/V can be batch-resident."""
    kv = 2 * 2 * _padded_bytes((n_heads, S, dh), mm_isz)     # K+V, double-buffered
    qb = 2 * _padded_bytes((n_heads, tq, dh), mm_isz)        # q block
    ob = 2 * _padded_bytes((tq, D), out_isz)                 # output block
    wb = 2 * (_padded_bytes((n_heads, dh, D), mm_isz)
              + _padded_bytes((1, D), 4))                    # w_out + b_out
    sc = (2 * _padded_bytes((n_heads, tq, 1), 4)
          + _padded_bytes((n_heads, tq, dh), 4))             # m, l, acc scratch
    return (kv + qb + ob + wb + sc) <= int(0.85 * vmem_limit)


# --------------------------- Pass 1: QKV projection ---------------------------
def _qkv_proj_kernel(x_ref, wq_ref, wk_ref, wv_ref, bq_ref, bk_ref, bv_ref,
                     q_ref, k_ref, v_ref, *, n_heads, scale):
    """q/k/v = x @ W + b, emitted head-major (H, ts, dh); Q pre-scaled."""
    x = x_ref[...]                                            # (ts, D)
    q = jnp.dot(x, wq_ref[...], preferred_element_type=jnp.float32) + bq_ref[...]
    k = jnp.dot(x, wk_ref[...], preferred_element_type=jnp.float32) + bk_ref[...]
    v = jnp.dot(x, wv_ref[...], preferred_element_type=jnp.float32) + bv_ref[...]
    dh = q_ref.shape[-1]
    for h in range(n_heads):                                  # static head split
        sl = slice(h * dh, (h + 1) * dh)
        # Fold 1/sqrt(d_head) into Q once (equivalent to scaling the scores).
        q_ref[h] = (q[:, sl] * scale).astype(q_ref.dtype)
        k_ref[h] = k[:, sl].astype(k_ref.dtype)
        v_ref[h] = v[:, sl].astype(v_ref.dtype)


# -------------------- Pass 2 helpers (shared by both kernels) -----------------
def _attend_heads(get_q, get_k, get_v, m_s, l_s, acc_s, *, n_heads, masked,
                  row_off, col_off, tq, tk, mask_value, exp_dtype):
    """One online-softmax update for a (tq x tk) chunk, all heads."""
    if masked:
        row = row_off + lax.broadcasted_iota(jnp.int32, (tq, tk), 0)
        col = col_off + lax.broadcasted_iota(jnp.int32, (tq, tk), 1)
        above_diag = col > row
    for h in range(n_heads):                                  # static head loop
        q = get_q(h)                                          # (tq, dh), pre-scaled
        k = get_k(h)                                          # (tk, dh)
        v = get_v(h)                                          # (tk, dh)
        # Q_h @ K_h^T via transposed-rhs contraction (no explicit .T).
        s = lax.dot_general(q, k, (((1,), (1,)), ((), ())),
                            preferred_element_type=jnp.float32)
        if masked:
            s = jnp.where(above_diag, mask_value, s)
        m_prev = m_s[h]                                       # (tq, 1) f32
        m_new = jnp.maximum(m_prev, jnp.max(s, axis=-1, keepdims=True))
        alpha = jnp.exp(m_prev - m_new)                       # (tq, 1) f32
        # The big (tq, tk) exp may run in bf16 on v6e/v7x (bf16 EUP); the sums
        # and the PV accumulation stay in f32.
        p = jnp.exp((s - m_new).astype(exp_dtype))
        l_s[h] = alpha * l_s[h] + jnp.sum(p.astype(jnp.float32),
                                          axis=-1, keepdims=True)
        acc_s[h] = alpha * acc_s[h] + jnp.dot(p.astype(v.dtype), v,
                                              preferred_element_type=jnp.float32)
        m_s[h] = m_new


def _project_out(wo_ref, bo_ref, o_ref, l_s, acc_s, *, n_heads, approx_recip):
    """Normalize the accumulator and apply the fused per-head out projection."""
    out = None
    for h in range(n_heads):
        attn_h = acc_s[h] * pl.reciprocal(l_s[h], approx=approx_recip)
        part = jnp.dot(attn_h.astype(wo_ref.dtype), wo_ref[h],
                       preferred_element_type=jnp.float32)
        out = part if out is None else out + part
    o_ref[...] = (out + bo_ref[...]).astype(o_ref.dtype)


# -------------------- Pass 2a: K/V batch-resident in VMEM ---------------------
def _flash_attn_resident_kernel(q_ref, k_ref, v_ref, wo_ref, bo_ref, o_ref,
                                m_s, l_s, acc_s, *, n_heads, causal, tq, tk,
                                n_kv, approx_recip, exp_dtype, mask_value):
    qi = pl.program_id(1)

    m_s[...] = jnp.full_like(m_s, -jnp.inf)
    l_s[...] = jnp.zeros_like(l_s)
    acc_s[...] = jnp.zeros_like(acc_s)

    def chunk(kc, masked):
        if isinstance(kc, int):
            off = kc * tk
        else:
            off = pl.multiple_of(kc * tk, tk)
        _attend_heads(
            lambda h: q_ref[h],
            lambda h: k_ref[h, pl.ds(off, tk), :],
            lambda h: v_ref[h, pl.ds(off, tk), :],
            m_s, l_s, acc_s, n_heads=n_heads, masked=masked,
            row_off=qi * tq, col_off=off, tq=tq, tk=tk,
            mask_value=mask_value, exp_dtype=exp_dtype)

    if causal:
        # Strictly-below-diagonal chunks need no mask; only the diagonal chunk
        # (kc == qi, since tq == tk) builds/applies the iota mask.
        def body(kc, carry):
            chunk(kc, masked=False)
            return carry
        lax.fori_loop(0, qi, body, 0)
        chunk(qi, masked=True)
    else:
        if n_kv <= 8:                         # static unroll: LLO visibility
            for kc in range(n_kv):
                chunk(kc, masked=False)
        else:
            def body(kc, carry):
                chunk(kc, masked=False)
                return carry
            lax.fori_loop(0, n_kv, body, 0)

    _project_out(wo_ref, bo_ref, o_ref, l_s, acc_s,
                 n_heads=n_heads, approx_recip=approx_recip)


# ------------------ Pass 2b: K/V streamed per grid step (fallback) ------------
def _flash_attn_stream_kernel(q_ref, k_ref, v_ref, wo_ref, bo_ref, o_ref,
                              m_s, l_s, acc_s, *, n_heads, causal, tq, tk,
                              approx_recip, exp_dtype, mask_value):
    qi = pl.program_id(1)
    ki = pl.program_id(2)
    nk = pl.num_programs(2)

    @pl.when(ki == 0)
    def _init():
        m_s[...] = jnp.full_like(m_s, -jnp.inf)
        l_s[...] = jnp.zeros_like(l_s)
        acc_s[...] = jnp.zeros_like(acc_s)

    def attend(masked):
        _attend_heads(
            lambda h: q_ref[h],
            lambda h: k_ref[h],
            lambda h: v_ref[h],
            m_s, l_s, acc_s, n_heads=n_heads, masked=masked,
            row_off=qi * tq, col_off=ki * tk, tq=tq, tk=tk,
            mask_value=mask_value, exp_dtype=exp_dtype)

    if causal:
        # Below-diagonal: unmasked fast path.  Diagonal: masked.  Above the
        # diagonal (ki > qi): skipped, and the K/V blocks are never DMA'd
        # thanks to the clamped index_map in the wrapper.
        @pl.when(ki < qi)
        def _below():
            attend(masked=False)

        @pl.when(ki == qi)
        def _diag():
            attend(masked=True)
    else:
        attend(masked=False)

    @pl.when(ki == nk - 1)
    def _finalize():
        _project_out(wo_ref, bo_ref, o_ref, l_s, acc_s,
                     n_heads=n_heads, approx_recip=approx_recip)


# ---------------------------------- Wrapper -----------------------------------
def self_attention(x, w_in, b_in, w_out, b_out, *, n_heads: int,
                   causal_mask: bool = False, matmul_dtype=jnp.bfloat16,
                   exp_dtype=None, kv_resident=None, vmem_limit_bytes=None):
    """x: (B, S, D); w_in: (D, 3D); b_in: (3D,); w_out: (D, D); b_out: (D,).

    Weights are the PyTorch nn.Linear weights pre-transposed to (in, out).
    exp_dtype: dtype for the (tq, tk) softmax exp (None -> f32; bf16 is a
    v6e/v7x EUP optimization).  kv_resident: None = auto (VMEM-budget based).
    """
    B, S, D = x.shape
    assert D % n_heads == 0, "d_embed must be divisible by n_heads"
    dh = D // n_heads
    scale = 1.0 / math.sqrt(dh)

    out_dtype = x.dtype
    mm = jnp.dtype(matmul_dtype)
    exp_dt = jnp.dtype(jnp.float32) if exp_dtype is None else jnp.dtype(exp_dtype)
    # Exact reciprocal for the f32 path; EUP approx (free slot) otherwise.
    approx_recip = (mm != jnp.dtype(jnp.float32))
    if vmem_limit_bytes is None:
        vmem_limit_bytes = _auto_vmem_limit()

    x_mm = x.astype(mm)
    w_q = w_in[:, 0 * D:1 * D].astype(mm)
    w_k = w_in[:, 1 * D:2 * D].astype(mm)
    w_v = w_in[:, 2 * D:3 * D].astype(mm)
    w_o = w_out.reshape(n_heads, dh, D).astype(mm)          # head-major rows
    b_q = b_in[0 * D:1 * D].reshape(1, D).astype(jnp.float32)
    b_k = b_in[1 * D:2 * D].reshape(1, D).astype(jnp.float32)
    b_v = b_in[2 * D:3 * D].reshape(1, D).astype(jnp.float32)
    b_o = b_out.reshape(1, D).astype(jnp.float32)

    ts = _pick_tile(S)
    tq = tk = _pick_tile(S)    # square tiles keep the causal path NaN-safe
    assert tq == tk
    n_kv = S // tk

    # ---- Pass 1: head-major q, k, v with the softmax scale folded into q ----
    q, k, v = pl.pallas_call(
        functools.partial(_qkv_proj_kernel, n_heads=n_heads, scale=scale),
        out_shape=[jax.ShapeDtypeStruct((B, n_heads, S, dh), mm)] * 3,
        grid_spec=pltpu.PrefetchScalarGridSpec(
            num_scalar_prefetch=0,
            grid=(B, S // ts),
            in_specs=[
                pl.BlockSpec((None, ts, D), lambda b, s: (b, s, 0)),   # x
                _const_spec((D, D), 2),                                # w_q
                _const_spec((D, D), 2),                                # w_k
                _const_spec((D, D), 2),                                # w_v
                _const_spec((1, D), 2),                                # b_q
                _const_spec((1, D), 2),                                # b_k
                _const_spec((1, D), 2),                                # b_v
            ],
            out_specs=[pl.BlockSpec((None, n_heads, ts, dh),
                                    lambda b, s: (b, 0, s, 0))] * 3,
        ),
        compiler_params=pltpu.CompilerParams(
            dimension_semantics=("parallel", "parallel"),
            vmem_limit_bytes=vmem_limit_bytes),
    )(x_mm, w_q, w_k, w_v, b_q, b_k, b_v)

    # ---- Pass 2: flash attention + fused (per-head) output projection ----
    if kv_resident is None:
        kv_resident = _kv_resident_fits(S, D, n_heads, dh, tq, mm.itemsize,
                                        jnp.dtype(out_dtype).itemsize,
                                        vmem_limit_bytes)

    common = dict(n_heads=n_heads, causal=causal_mask, tq=tq, tk=tk,
                  approx_recip=approx_recip, exp_dtype=exp_dt,
                  mask_value=_MASK_VALUE)

    if kv_resident:
        kernel = functools.partial(_flash_attn_resident_kernel, n_kv=n_kv,
                                   **common)
        grid = (B, S // tq)
        in_specs = [
            pl.BlockSpec((None, n_heads, tq, dh), lambda b, qi: (b, 0, qi, 0)),
            pl.BlockSpec((None, n_heads, S, dh), lambda b, qi: (b, 0, 0, 0)),
            pl.BlockSpec((None, n_heads, S, dh), lambda b, qi: (b, 0, 0, 0)),
            _const_spec((n_heads, dh, D), 2),                  # w_out
            _const_spec((1, D), 2),                            # b_out
        ]
        out_specs = pl.BlockSpec((None, tq, D), lambda b, qi: (b, qi, 0))
        dims = ("parallel", "parallel")
    else:
        kernel = functools.partial(_flash_attn_stream_kernel, **common)
        grid = (B, S // tq, n_kv)
        if causal_mask:
            # Clamp the K/V block index at the diagonal so skipped
            # above-diagonal steps issue no DMA (unchanged index => no fetch).
            kv_map = lambda b, qi, ki: (b, 0, jnp.minimum(ki, qi), 0)
        else:
            kv_map = lambda b, qi, ki: (b, 0, ki, 0)
        in_specs = [
            pl.BlockSpec((None, n_heads, tq, dh),
                         lambda b, qi, ki: (b, 0, qi, 0)),
            pl.BlockSpec((None, n_heads, tk, dh), kv_map),
            pl.BlockSpec((None, n_heads, tk, dh), kv_map),
            _const_spec((n_heads, dh, D), 3),                  # w_out
            _const_spec((1, D), 3),                            # b_out
        ]
        out_specs = pl.BlockSpec((None, tq, D), lambda b, qi, ki: (b, qi, 0))
        dims = ("parallel", "parallel", "arbitrary")

    return pl.pallas_call(
        kernel,
        out_shape=jax.ShapeDtypeStruct((B, S, D), out_dtype),
        grid_spec=pltpu.PrefetchScalarGridSpec(
            num_scalar_prefetch=0,
            grid=grid,
            in_specs=in_specs,
            out_specs=out_specs,
            scratch_shapes=[
                pltpu.VMEM((n_heads, tq, 1), jnp.float32),    # running max m
                pltpu.VMEM((n_heads, tq, 1), jnp.float32),    # running sum l
                pltpu.VMEM((n_heads, tq, dh), jnp.float32),   # head-major acc
            ],
        ),
        compiler_params=pltpu.CompilerParams(
            dimension_semantics=dims,
            vmem_limit_bytes=vmem_limit_bytes),
    )(q, k, v, w_o, b_o)


# --------------------------------- Reference ----------------------------------
def _reference(x, w_in, b_in, w_out, b_out, *, n_heads: int,
               causal_mask: bool = False):
    """Pure-JAX reference mirroring the PyTorch forward (f32)."""
    B, S, D = x.shape
    dh = D // n_heads
    qkv = x @ w_in + b_in                                  # (B, S, 3D)
    q, k, v = jnp.split(qkv, 3, axis=-1)

    def heads(t):
        return t.reshape(B, S, n_heads, dh).transpose(0, 2, 1, 3)  # (B,H,S,dh)

    q, k, v = heads(q), heads(k), heads(v)
    w = jnp.einsum("bhqd,bhkd->bhqk", q, k)
    if causal_mask:
        mask = jnp.triu(jnp.ones((S, S), dtype=bool), 1)
        w = jnp.where(mask, -jnp.inf, w)
    w = w / math.sqrt(dh)
    w = jax.nn.softmax(w, axis=-1)
    o = jnp.einsum("bhqk,bhkd->bhqd", w, v)
    o = o.transpose(0, 2, 1, 3).reshape(B, S, D)
    return o @ w_out + b_out


if __name__ == "__main__":
    B, S, D, H = 2, 8, 32, 4

    key = jax.random.PRNGKey(0)
    kx, kw1, kb1, kw2, kb2 = jax.random.split(key, 5)

    x = jax.random.normal(kx, (B, S, D), dtype=jnp.float32)

    bound = 1.0 / math.sqrt(D)
    # nn.Linear(d_embed, 3*d_embed) weight (3D, D) -> we pass transpose (D, 3D).
    w_in = jax.random.uniform(kw1, (D, 3 * D), jnp.float32, -bound, bound)
    b_in = jax.random.uniform(kb1, (3 * D,), jnp.float32, -bound, bound)
    # nn.Linear(d_embed, d_embed) weight (D, D) -> pass transpose (D, D).
    w_out = jax.random.uniform(kw2, (D, D), jnp.float32, -bound, bound)
    b_out = jax.random.uniform(kb2, (D,), jnp.float32, -bound, bound)

    # f32 path, auto (K/V-resident) mode: non-causal and causal, tight tol.
    for causal in (False, True):
        out = self_attention(x, w_in, b_in, w_out, b_out, n_heads=H,
                             causal_mask=causal, matmul_dtype=jnp.float32)
        out = jax.block_until_ready(out)
        ref = _reference(x, w_in, b_in, w_out, b_out, n_heads=H,
                         causal_mask=causal)
        assert out.shape == (B, S, D)
        assert jnp.allclose(out, ref, atol=1e-4, rtol=1e-4), \
            f"f32 resident mismatch vs reference (causal={causal})"

    # f32 path, streaming K/V fallback forced: non-causal and causal.
    for causal in (False, True):
        out = self_attention(x, w_in, b_in, w_out, b_out, n_heads=H,
                             causal_mask=causal, matmul_dtype=jnp.float32,
                             kv_resident=False)
        out = jax.block_until_ready(out)
        ref = _reference(x, w_in, b_in, w_out, b_out, n_heads=H,
                         causal_mask=causal)
        assert jnp.allclose(out, ref, atol=1e-4, rtol=1e-4), \
            f"f32 streaming mismatch vs reference (causal={causal})"

    # bf16 MXU path with bf16 exp (v6e/v7x EUP config) -- looser tolerance.
    out_bf = self_attention(x, w_in, b_in, w_out, b_out, n_heads=H,
                            causal_mask=True, matmul_dtype=jnp.bfloat16,
                            exp_dtype=jnp.bfloat16)
    out_bf = jax.block_until_ready(out_bf)
    ref = _reference(x, w_in, b_in, w_out, b_out, n_heads=H, causal_mask=True)
    assert jnp.allclose(out_bf.astype(jnp.float32), ref,
                        atol=5e-2, rtol=5e-2), "bf16 mismatch vs reference"

    print("KERNEL_OK")
</pallas_src>

<mosaic_0001>
module attributes {stable_mosaic.version = 11 : i64} {
  func.func @_qkv_proj_kernel(%arg0: i32, %arg1: i32, %arg2: memref<1x8x32xf32, #tpu.memory_space<vmem>>, %arg3: memref<32x32xf32, #tpu.memory_space<vmem>>, %arg4: memref<32x32xf32, #tpu.memory_space<vmem>>, %arg5: memref<32x32xf32, #tpu.memory_space<vmem>>, %arg6: memref<1x32xf32, #tpu.memory_space<vmem>>, %arg7: memref<1x32xf32, #tpu.memory_space<vmem>>, %arg8: memref<1x32xf32, #tpu.memory_space<vmem>>, %arg9: memref<1x4x8x8xf32, #tpu.memory_space<vmem>>, %arg10: memref<1x4x8x8xf32, #tpu.memory_space<vmem>>, %arg11: memref<1x4x8x8xf32, #tpu.memory_space<vmem>>) attributes {dimension_semantics = [#tpu.dimension_semantics<parallel>, #tpu.dimension_semantics<parallel>], iteration_bounds = array<i64: 2, 1>, scalar_prefetch = 0 : i64, scratch_operands = 0 : i64, tpu.core_type = #tpu.core_type<tc>, window_params = [{transform_indices = @transform_0, window_bounds = array<i64: 1, 8, 32>}, {pipeline_mode = #tpu.pipeline_mode<synchronous>, transform_indices = @transform_1, window_bounds = array<i64: 32, 32>}, {pipeline_mode = #tpu.pipeline_mode<synchronous>, transform_indices = @transform_2, window_bounds = array<i64: 32, 32>}, {pipeline_mode = #tpu.pipeline_mode<synchronous>, transform_indices = @transform_3, window_bounds = array<i64: 32, 32>}, {pipeline_mode = #tpu.pipeline_mode<synchronous>, transform_indices = @transform_4, window_bounds = array<i64: 1, 32>}, {pipeline_mode = #tpu.pipeline_mode<synchronous>, transform_indices = @transform_5, window_bounds = array<i64: 1, 32>}, {pipeline_mode = #tpu.pipeline_mode<synchronous>, transform_indices = @transform_6, window_bounds = array<i64: 1, 32>}, {transform_indices = @transform_7, window_bounds = array<i64: 1, 4, 8, 8>}, {transform_indices = @transform_8, window_bounds = array<i64: 1, 4, 8, 8>}, {transform_indices = @transform_9, window_bounds = array<i64: 1, 4, 8, 8>}]} {
    %c0 = arith.constant 0 : index
    %c0_0 = arith.constant 0 : index
    %c0_1 = arith.constant 0 : index
    %0 = vector.load %arg2[%c0, %c0_0, %c0_1] : memref<1x8x32xf32, #tpu.memory_space<vmem>>, vector<1x8x32xf32>
    %1 = vector.shape_cast %0 : vector<1x8x32xf32> to vector<8x32xf32>
    %c0_2 = arith.constant 0 : index
    %c0_3 = arith.constant 0 : index
    %2 = vector.load %arg3[%c0_2, %c0_3] : memref<32x32xf32, #tpu.memory_space<vmem>>, vector<32x32xf32>
    %cst = arith.constant dense<0.000000e+00> : vector<8x32xf32>
    %3 = tpu.matmul %1, %2, %cst {dimension_numbers = #tpu.dot_dimension_numbers<[1], [0], [0], [1], [0, 0, 1, 1], [], []>} : vector<8x32xf32>, vector<32x32xf32>, vector<8x32xf32> -> vector<8x32xf32>
    %c0_4 = arith.constant 0 : index
    %c0_5 = arith.constant 0 : index
    %4 = vector.load %arg6[%c0_4, %c0_5] : memref<1x32xf32, #tpu.memory_space<vmem>>, vector<1x32xf32>
    %5 = vector.broadcast %4 : vector<1x32xf32> to vector<8x32xf32>
    %6 = arith.addf %3, %5 : vector<8x32xf32>
    %c0_6 = arith.constant 0 : index
    %c0_7 = arith.constant 0 : index
    %7 = vector.load %arg4[%c0_6, %c0_7] : memref<32x32xf32, #tpu.memory_space<vmem>>, vector<32x32xf32>
    %cst_8 = arith.constant dense<0.000000e+00> : vector<8x32xf32>
    %8 = tpu.matmul %1, %7, %cst_8 {dimension_numbers = #tpu.dot_dimension_numbers<[1], [0], [0], [1], [0, 0, 1, 1], [], []>} : vector<8x32xf32>, vector<32x32xf32>, vector<8x32xf32> -> vector<8x32xf32>
    %c0_9 = arith.constant 0 : index
    %c0_10 = arith.constant 0 : index
    %9 = vector.load %arg7[%c0_9, %c0_10] : memref<1x32xf32, #tpu.memory_space<vmem>>, vector<1x32xf32>
    %10 = vector.broadcast %9 : vector<1x32xf32> to vector<8x32xf32>
    %11 = arith.addf %8, %10 : vector<8x32xf32>
    %c0_11 = arith.constant 0 : index
    %c0_12 = arith.constant 0 : index
    %12 = vector.load %arg5[%c0_11, %c0_12] : memref<32x32xf32, #tpu.memory_space<vmem>>, vector<32x32xf32>
    %cst_13 = arith.constant dense<0.000000e+00> : vector<8x32xf32>
    %13 = tpu.matmul %1, %12, %cst_13 {dimension_numbers = #tpu.dot_dimension_numbers<[1], [0], [0], [1], [0, 0, 1, 1], [], []>} : vector<8x32xf32>, vector<32x32xf32>, vector<8x32xf32> -> vector<8x32xf32>
    %c0_14 = arith.constant 0 : index
    %c0_15 = arith.constant 0 : index
    %14 = vector.load %arg8[%c0_14, %c0_15] : memref<1x32xf32, #tpu.memory_space<vmem>>, vector<1x32xf32>
    %15 = vector.broadcast %14 : vector<1x32xf32> to vector<8x32xf32>
    %16 = arith.addf %13, %15 : vector<8x32xf32>
    %17 = vector.extract_strided_slice %6 {offsets = [0, 0], sizes = [8, 8], strides = [1, 1]} : vector<8x32xf32> to vector<8x8xf32>
    %cst_16 = arith.constant 0.353553385 : f32
    %18 = vector.broadcast %cst_16 : f32 to vector<8x8xf32>
    %19 = arith.mulf %17, %18 : vector<8x8xf32>
    %c0_17 = arith.constant 0 : index
    %c0_18 = arith.constant 0 : index
    %c0_19 = arith.constant 0 : index
    %c0_20 = arith.constant 0 : index
    %20 = vector.load %arg9[%c0_17, %c0_18, %c0_19, %c0_20] : memref<1x4x8x8xf32, #tpu.memory_space<vmem>>, vector<1x1x8x8xf32>
    %21 = vector.shape_cast %20 : vector<1x1x8x8xf32> to vector<8x8xf32>
    %22 = vector.shape_cast %19 : vector<8x8xf32> to vector<1x1x8x8xf32>
    tpu.vector_store %arg9[%c0_17, %c0_18, %c0_19, %c0_20], %22 {strides = array<i32>} : memref<1x4x8x8xf32, #tpu.memory_space<vmem>>, vector<1x1x8x8xf32>,
    %23 = vector.extract_strided_slice %11 {offsets = [0, 0], sizes = [8, 8], strides = [1, 1]} : vector<8x32xf32> to vector<8x8xf32>
    %c0_21 = arith.constant 0 : index
    %c0_22 = arith.constant 0 : index
    %c0_23 = arith.constant 0 : index
    %c0_24 = arith.constant 0 : index
    %24 = vector.load %arg10[%c0_21, %c0_22, %c0_23, %c0_24] : memref<1x4x8x8xf32, #tpu.memory_space<vmem>>, vector<1x1x8x8xf32>
    %25 = vector.shape_cast %24 : vector<1x1x8x8xf32> to vector<8x8xf32>
    %26 = vector.shape_cast %23 : vector<8x8xf32> to vector<1x1x8x8xf32>
    tpu.vector_store %arg10[%c0_21, %c0_22, %c0_23, %c0_24], %26 {strides = array<i32>} : memref<1x4x8x8xf32, #tpu.memory_space<vmem>>, vector<1x1x8x8xf32>,
    %27 = vector.extract_strided_slice %16 {offsets = [0, 0], sizes = [8, 8], strides = [1, 1]} : vector<8x32xf32> to vector<8x8xf32>
    %c0_25 = arith.constant 0 : index
    %c0_26 = arith.constant 0 : index
    %c0_27 = arith.constant 0 : index
    %c0_28 = arith.constant 0 : index
    %28 = vector.load %arg11[%c0_25, %c0_26, %c0_27, %c0_28] : memref<1x4x8x8xf32, #tpu.memory_space<vmem>>, vector<1x1x8x8xf32>
    %29 = vector.shape_cast %28 : vector<1x1x8x8xf32> to vector<8x8xf32>
    %30 = vector.shape_cast %27 : vector<8x8xf32> to vector<1x1x8x8xf32>
    tpu.vector_store %arg11[%c0_25, %c0_26, %c0_27, %c0_28], %30 {strides = array<i32>} : memref<1x4x8x8xf32, #tpu.memory_space<vmem>>, vector<1x1x8x8xf32>,
    %31 = vector.extract_strided_slice %6 {offsets = [0, 8], sizes = [8, 8], strides = [1, 1]} : vector<8x32xf32> to vector<8x8xf32>
    %cst_29 = arith.constant 0.353553385 : f32
    %32 = vector.broadcast %cst_29 : f32 to vector<8x8xf32>
    %33 = arith.mulf %31, %32 : vector<8x8xf32>
    %c0_30 = arith.constant 0 : index
    %c1 = arith.constant 1 : index
    %c0_31 = arith.constant 0 : index
    %c0_32 = arith.constant 0 : index
    %34 = vector.load %arg9[%c0_30, %c1, %c0_31, %c0_32] : memref<1x4x8x8xf32, #tpu.memory_space<vmem>>, vector<1x1x8x8xf32>
    %35 = vector.shape_cast %34 : vector<1x1x8x8xf32> to vector<8x8xf32>
    %36 = vector.shape_cast %33 : vector<8x8xf32> to vector<1x1x8x8xf32>
    tpu.vector_store %arg9[%c0_30, %c1, %c0_31, %c0_32], %36 {strides = array<i32>} : memref<1x4x8x8xf32, #tpu.memory_space<vmem>>, vector<1x1x8x8xf32>,
    %37 = vector.extract_strided_slice %11 {offsets = [0, 8], sizes = [8, 8], strides = [1, 1]} : vector<8x32xf32> to vector<8x8xf32>
    %c0_33 = arith.constant 0 : index
    %c1_34 = arith.constant 1 : index
    %c0_35 = arith.constant 0 : index
    %c0_36 = arith.constant 0 : index
    %38 = vector.load %arg10[%c0_33, %c1_34, %c0_35, %c0_36] : memref<1x4x8x8xf32, #tpu.memory_space<vmem>>, vector<1x1x8x8xf32>
    %39 = vector.shape_cast %38 : vector<1x1x8x8xf32> to vector<8x8xf32>
    %40 = vector.shape_cast %37 : vector<8x8xf32> to vector<1x1x8x8xf32>
    tpu.vector_store %arg10[%c0_33, %c1_34, %c0_35, %c0_36], %40 {strides = array<i32>} : memref<1x4x8x8xf32, #tpu.memory_space<vmem>>, vector<1x1x8x8xf32>,
    %41 = vector.extract_strided_slice %16 {offsets = [0, 8], sizes = [8, 8], strides = [1, 1]} : vector<8x32xf32> to vector<8x8xf32>
    %c0_37 = arith.constant 0 : index
    %c1_38 = arith.constant 1 : index
    %c0_39 = arith.constant 0 : index
    %c0_40 = arith.constant 0 : index
    %42 = vector.load %arg11[%c0_37, %c1_38, %c0_39, %c0_40] : memref<1x4x8x8xf32, #tpu.memory_space<vmem>>, vector<1x1x8x8xf32>
    %43 = vector.shape_cast %42 : vector<1x1x8x8xf32> to vector<8x8xf32>
    %44 = vector.shape_cast %41 : vector<8x8xf32> to vector<1x1x8x8xf32>
    tpu.vector_store %arg11[%c0_37, %c1_38, %c0_39, %c0_40], %44 {strides = array<i32>} : memref<1x4x8x8xf32, #tpu.memory_space<vmem>>, vector<1x1x8x8xf32>,
    %45 = vector.extract_strided_slice %6 {offsets = [0, 16], sizes = [8, 8], strides = [1, 1]} : vector<8x32xf32> to vector<8x8xf32>
    %cst_41 = arith.constant 0.353553385 : f32
    %46 = vector.broadcast %cst_41 : f32 to vector<8x8xf32>
    %47 = arith.mulf %45, %46 : vector<8x8xf32>
    %c0_42 = arith.constant 0 : index
    %c2 = arith.constant 2 : index
    %c0_43 = arith.constant 0 : index
    %c0_44 = arith.constant 0 : index
    %48 = vector.load %arg9[%c0_42, %c2, %c0_43, %c0_44] : memref<1x4x8x8xf32, #tpu.memory_space<vmem>>, vector<1x1x8x8xf32>
    %49 = vector.shape_cast %48 : vector<1x1x8x8xf32> to vector<8x8xf32>
    %50 = vector.shape_cast %47 : vector<8x8xf32> to vector<1x1x8x8xf32>
    tpu.vector_store %arg9[%c0_42, %c2, %c0_43, %c0_44], %50 {strides = array<i32>} : memref<1x4x8x8xf32, #tpu.memory_space<vmem>>, vector<1x1x8x8xf32>,
    %51 = vector.extract_strided_slice %11 {offsets = [0, 16], sizes = [8, 8], strides = [1, 1]} : vector<8x32xf32> to vector<8x8xf32>
    %c0_45 = arith.constant 0 : index
    %c2_46 = arith.constant 2 : index
    %c0_47 = arith.constant 0 : index
    %c0_48 = arith.constant 0 : index
    %52 = vector.load %arg10[%c0_45, %c2_46, %c0_47, %c0_48] : memref<1x4x8x8xf32, #tpu.memory_space<vmem>>, vector<1x1x8x8xf32>
    %53 = vector.shape_cast %52 : vector<1x1x8x8xf32> to vector<8x8xf32>
    %54 = vector.shape_cast %51 : vector<8x8xf32> to vector<1x1x8x8xf32>
    tpu.vector_store %arg10[%c0_45, %c2_46, %c0_47, %c0_48], %54 {strides = array<i32>} : memref<1x4x8x8xf32, #tpu.memory_space<vmem>>, vector<1x1x8x8xf32>,
    %55 = vector.extract_strided_slice %16 {offsets = [0, 16], sizes = [8, 8], strides = [1, 1]} : vector<8x32xf32> to vector<8x8xf32>
    %c0_49 = arith.constant 0 : index
    %c2_50 = arith.constant 2 : index
    %c0_51 = arith.constant 0 : index
    %c0_52 = arith.constant 0 : index
    %56 = vector.load %arg11[%c0_49, %c2_50, %c0_51, %c0_52] : memref<1x4x8x8xf32, #tpu.memory_space<vmem>>, vector<1x1x8x8xf32>
    %57 = vector.shape_cast %56 : vector<1x1x8x8xf32> to vector<8x8xf32>
    %58 = vector.shape_cast %55 : vector<8x8xf32> to vector<1x1x8x8xf32>
    tpu.vector_store %arg11[%c0_49, %c2_50, %c0_51, %c0_52], %58 {strides = array<i32>} : memref<1x4x8x8xf32, #tpu.memory_space<vmem>>, vector<1x1x8x8xf32>,
    %59 = vector.extract_strided_slice %6 {offsets = [0, 24], sizes = [8, 8], strides = [1, 1]} : vector<8x32xf32> to vector<8x8xf32>
    %cst_53 = arith.constant 0.353553385 : f32
    %60 = vector.broadcast %cst_53 : f32 to vector<8x8xf32>
    %61 = arith.mulf %59, %60 : vector<8x8xf32>
    %c0_54 = arith.constant 0 : index
    %c3 = arith.constant 3 : index
    %c0_55 = arith.constant 0 : index
    %c0_56 = arith.constant 0 : index
    %62 = vector.load %arg9[%c0_54, %c3, %c0_55, %c0_56] : memref<1x4x8x8xf32, #tpu.memory_space<vmem>>, vector<1x1x8x8xf32>
    %63 = vector.shape_cast %62 : vector<1x1x8x8xf32> to vector<8x8xf32>
    %64 = vector.shape_cast %61 : vector<8x8xf32> to vector<1x1x8x8xf32>
    tpu.vector_store %arg9[%c0_54, %c3, %c0_55, %c0_56], %64 {strides = array<i32>} : memref<1x4x8x8xf32, #tpu.memory_space<vmem>>, vector<1x1x8x8xf32>,
    %65 = vector.extract_strided_slice %11 {offsets = [0, 24], sizes = [8, 8], strides = [1, 1]} : vector<8x32xf32> to vector<8x8xf32>
    %c0_57 = arith.constant 0 : index
    %c3_58 = arith.constant 3 : index
    %c0_59 = arith.constant 0 : index
    %c0_60 = arith.constant 0 : index
    %66 = vector.load %arg10[%c0_57, %c3_58, %c0_59, %c0_60] : memref<1x4x8x8xf32, #tpu.memory_space<vmem>>, vector<1x1x8x8xf32>
    %67 = vector.shape_cast %66 : vector<1x1x8x8xf32> to vector<8x8xf32>
    %68 = vector.shape_cast %65 : vector<8x8xf32> to vector<1x1x8x8xf32>
    tpu.vector_store %arg10[%c0_57, %c3_58, %c0_59, %c0_60], %68 {strides = array<i32>} : memref<1x4x8x8xf32, #tpu.memory_space<vmem>>, vector<1x1x8x8xf32>,
    %69 = vector.extract_strided_slice %16 {offsets = [0, 24], sizes = [8, 8], strides = [1, 1]} : vector<8x32xf32> to vector<8x8xf32>
    %c0_61 = arith.constant 0 : index
    %c3_62 = arith.constant 3 : index
    %c0_63 = arith.constant 0 : index
    %c0_64 = arith.constant 0 : index
    %70 = vector.load %arg11[%c0_61, %c3_62, %c0_63, %c0_64] : memref<1x4x8x8xf32, #tpu.memory_space<vmem>>, vector<1x1x8x8xf32>
    %71 = vector.shape_cast %70 : vector<1x1x8x8xf32> to vector<8x8xf32>
    %72 = vector.shape_cast %69 : vector<8x8xf32> to vector<1x1x8x8xf32>
    tpu.vector_store %arg11[%c0_61, %c3_62, %c0_63, %c0_64], %72 {strides = array<i32>} : memref<1x4x8x8xf32, #tpu.memory_space<vmem>>, vector<1x1x8x8xf32>,
    return
  }
  func.func @transform_0(%arg0: i32, %arg1: i32) -> (i32, i32, i32) {
    %c0_i32 = arith.constant 0 : i32
    %c0_i32_0 = arith.constant 0 : i32
    return %arg0, %arg1, %c0_i32 : i32, i32, i32
  }
  func.func @transform_1(%arg0: i32, %arg1: i32) -> (i32, i32) {
    %c0_i32 = arith.constant 0 : i32
    %c0_i32_0 = arith.constant 0 : i32
    %c0_i32_1 = arith.constant 0 : i32
    return %c0_i32, %c0_i32_0 : i32, i32
  }
  func.func @transform_2(%arg0: i32, %arg1: i32) -> (i32, i32) {
    %c0_i32 = arith.constant 0 : i32
    %c0_i32_0 = arith.constant 0 : i32
    %c0_i32_1 = arith.constant 0 : i32
    return %c0_i32, %c0_i32_0 : i32, i32
  }
  func.func @transform_3(%arg0: i32, %arg1: i32) -> (i32, i32) {
    %c0_i32 = arith.constant 0 : i32
    %c0_i32_0 = arith.constant 0 : i32
    %c0_i32_1 = arith.constant 0 : i32
    return %c0_i32, %c0_i32_0 : i32, i32
  }
  func.func @transform_4(%arg0: i32, %arg1: i32) -> (i32, i32) {
    %c0_i32 = arith.constant 0 : i32
    %c0_i32_0 = arith.constant 0 : i32
    %c0_i32_1 = arith.constant 0 : i32
    return %c0_i32, %c0_i32_0 : i32, i32
  }
  func.func @transform_5(%arg0: i32, %arg1: i32) -> (i32, i32) {
    %c0_i32 = arith.constant 0 : i32
    %c0_i32_0 = arith.constant 0 : i32
    %c0_i32_1 = arith.constant 0 : i32
    return %c0_i32, %c0_i32_0 : i32, i32
  }
  func.func @transform_6(%arg0: i32, %arg1: i32) -> (i32, i32) {
    %c0_i32 = arith.constant 0 : i32
    %c0_i32_0 = arith.constant 0 : i32
    %c0_i32_1 = arith.constant 0 : i32
    return %c0_i32, %c0_i32_0 : i32, i32
  }
  func.func @transform_7(%arg0: i32, %arg1: i32) -> (i32, i32, i32, i32) {
    %c0_i32 = arith.constant 0 : i32
    %c0_i32_0 = arith.constant 0 : i32
    %c0_i32_1 = arith.constant 0 : i32
    return %arg0, %c0_i32, %arg1, %c0_i32_0 : i32, i32, i32, i32
  }
  func.func @transform_8(%arg0: i32, %arg1: i32) -> (i32, i32, i32, i32) {
    %c0_i32 = arith.constant 0 : i32
    %c0_i32_0 = arith.constant 0 : i32
    %c0_i32_1 = arith.constant 0 : i32
    return %arg0, %c0_i32, %arg1, %c0_i32_0 : i32, i32, i32, i32
  }
  func.func @transform_9(%arg0: i32, %arg1: i32) -> (i32, i32, i32, i32) {
    %c0_i32 = arith.constant 0 : i32
    %c0_i32_0 = arith.constant 0 : i32
    %c0_i32_1 = arith.constant 0 : i32
    return %arg0, %c0_i32, %arg1, %c0_i32_0 : i32, i32, i32, i32
  }
}

</mosaic_0001>

<llo_original>
// kernel: tpu_custom_call.1
$region0: #{tpu_custom_call.1}
  #allocation0 [shape = 'u32[]', space=smem, size = 0x4, offset = 0x4, fixed_abs, tag = 'smem constant byte address 0x4 - core index']
  #allocation1 [shape = 'u32[72,128]{1,0:T(1,128)}', space=vmem, size = 0x9000, scoped, tag = 'internal scratch']
  %s0 = inlined_call_operand.hbm [shape: f32[2,8,32], index: 0, kind: input, shape index: {}]
  %s1 = inlined_call_operand.hbm [shape: f32[32,32], index: 1, kind: input, shape index: {}]
  %s2 = inlined_call_operand.hbm [shape: f32[32,32], index: 2, kind: input, shape index: {}]
  %s3 = inlined_call_operand.hbm [shape: f32[32,32], index: 3, kind: input, shape index: {}]
  %s4 = inlined_call_operand.vmem [shape: f32[1,32], index: 4, kind: input, shape index: {}]
  %s5 = inlined_call_operand.vmem [shape: f32[1,32], index: 5, kind: input, shape index: {}]
  %s6 = inlined_call_operand.vmem [shape: f32[1,32], index: 6, kind: input, shape index: {}]
  %s7 = inlined_call_operand.hbm [shape: f32[2,4,8,8], index: 7, kind: output, shape index: {0}]
  %s8 = inlined_call_operand.hbm [shape: f32[2,4,8,8], index: 8, kind: output, shape index: {1}]
  %s9 = inlined_call_operand.hbm [shape: f32[2,4,8,8], index: 9, kind: output, shape index: {2}]
  %10 = xla_tuple %s7, %s8, %s9
  %s11 = sld [smem:[#allocation0]]
  $region93: #{tpu_custom_call.1} parent=0
    _
  %s13 = ssub.s32 1, %s11
  %s14 = scalar_select 0, %s13, %s11
  $region1: #{tpu_custom_call.1} parent=0
    #allocation2 [shape = 'u8[8192]{0}', space=vmem, size = 0x2000, scoped, tag = 'input window, operand 0']
    #allocation3 [shape = 's32[2]{0}', space=sflag, size = 0x8, scoped, tag = 'scoped memory for tpu_custom_call.1']
    #allocation4 [shape = 's32[2]{0}', space=sflag, size = 0x8, scoped, tag = 'scoped memory for tpu_custom_call.1']
    #allocation5 [shape = 'u8[16384]{0}', space=vmem, size = 0x4000, scoped, tag = 'input window, operand 1, single buffered']
    #allocation6 [shape = 's32[1]{0}', space=sflag, size = 0x4, scoped, tag = 'scoped memory for tpu_custom_call.1']
    #allocation7 [shape = 'u8[16384]{0}', space=vmem, size = 0x4000, scoped, tag = 'input window, operand 2, single buffered']
    #allocation8 [shape = 'u8[16384]{0}', space=vmem, size = 0x4000, scoped, tag = 'input window, operand 3, single buffered']
    #allocation9 [shape = 's32[1]{0}', space=sflag, size = 0x4, scoped, tag = 'scoped memory for tpu_custom_call.1']
    #allocation10 [shape = 'u8[32768]{0}', space=vmem, size = 0x8000, scoped, tag = 'output window, operand 0']
    #allocation11 [shape = 'u8[32768]{0}', space=vmem, size = 0x8000, scoped, tag = 'output window, operand 1']
    #allocation12 [shape = 's32[2]{0}', space=sflag, size = 0x8, scoped, tag = 'scoped memory for tpu_custom_call.1']
    #allocation13 [shape = 'u8[32768]{0}', space=vmem, size = 0x8000, scoped, tag = 'output window, operand 2']
    %15 = vsyncpa [#allocation3], 0
    %s16 = scalar_lea.sflag [#allocation3], 1
    %17 = vsyncpa %s16, 0
    %18 = vsyncpa [#allocation6], 0
    %19 = vsyncpa [#allocation9], 0
    %20 = vsyncpa [#allocation4], 0
    %s21 = scalar_lea.sflag [#allocation4], 1
    %22 = vsyncpa %s21, 0
    %23 = vsyncpa [#allocation12], 0
    %s24 = scalar_lea.sflag [#allocation12], 1
    %25 = vsyncpa %s24, 0
    loop: start=0, step=1, limit=4
    $region2: #{tpu_custom_call.1} parent=1 // loop_pre_header
      _
    $region3: #{tpu_custom_call.1} parent=1 // loop_header
      %s27 = sphi 0, %s31
      %p28 = scmp.ge.s32.totalorder %s27, 4
      %s34 = sphi 0, %s46
      %s35 = sphi 0, %s42
      %s36 = sphi 0, %s34
      %s37 = sphi 0, %s35
      %s38 = sphi 0, %s36
      %s39 = sphi 0, %s37
      %s51 = sphi 0, %s53
      %s54 = sphi 0, %s51
      %s55 = sphi 0, %s54
      %s71 = sphi 0, %s55
      %s75 = sphi 0, %s75
      %s77 = sphi 0, %s75
      %s78 = sphi 0, %s77
      %s92 = sphi 0, %s78
      %s96 = sphi 0, %s96
      %s98 = sphi 0, %s96
      %s99 = sphi 0, %s98
      %s113 = sphi 0, %s99
      %s117 = sphi 0, %s117
      %s119 = sphi 0, %s117
      %s120 = sphi 0, %s119
      %s134 = sphi 0, %s120
      %s138 = sphi 0, %s138
      %s140 = sphi 0, %s138
      %s141 = sphi 0, %s140
      %s155 = sphi 0, %s141
      %s159 = sphi 0, %s159
      %s161 = sphi 0, %s159
      %s162 = sphi 0, %s161
      %s176 = sphi 0, %s162
      %s180 = sphi 0, %s180
      %s182 = sphi 0, %s180
      %s183 = sphi 0, %s182
      %s197 = sphi 0, %s183
      %s205 = sphi 0, %s207
      %s208 = sphi 0, %s205
      %s209 = sphi 0, %s208
      %s225 = sphi 0, %s209
      %s233 = sphi 0, %s235
      %s236 = sphi 0, %s233
      %s237 = sphi 0, %s236
      %s253 = sphi 0, %s237
      %s261 = sphi 0, %s263
      %s264 = sphi 0, %s261
      %s265 = sphi 0, %s264
      %s281 = sphi 0, %s265
    $region4: #{tpu_custom_call.1} parent=1 // loop_header_branch
      %30 = sbr.rel (%p28) target = $region8
    $region5: #{tpu_custom_call.1} parent=1 // loop_body
      %s32 = ssub.s32 %s27, 1
      %s33 = ssub.s32 %s27, 2
      %s40 = sadd.s32 1, %s35
      %p41 = scmp.ge.s32.totalorder %s40, 1
      %s42 = scalar_select %p41, 0, %s40
      %s43 = sadd.s32 1, %s34
      %s44 = scalar_select %p41, %s43, %s34
      %p45 = scmp.ge.s32.totalorder %s44, 2
      %s46 = scalar_select %p45, 0, %s44
      %s47 = ssub.s32 %s34, %s46
      %s48 = ssub.s32 %s35, %s42
      %s49 = sor.u32 %s47, %s48
      %p50 = scmp.eq.s32.totalorder %s49, 0
      %s52 = sadd.s32 %s51, 1
      %s53 = scalar_select %p50, %s51, %s52
      %p56 = pneg %p50
      %p57 = scmp.eq.s32.totalorder %s27, 1
      %p58 = por %p56, %p57
      %p59 = scmp.ne.s32.totalorder %s51, %s54
      %p60 = scmp.eq.s32.totalorder %s27, 0
      %p61 = por %p59, %p60
      %p62 = scmp.ne.s32.totalorder %s51, %s54
      %p63 = scmp.eq.s32.totalorder %s32, 1
      %p64 = por %p62, %p63
      %p65 = scmp.ne.s32.totalorder %s54, %s55
      %p66 = scmp.eq.s32.totalorder %s32, 0
      %p67 = por %p65, %p66
      %p68 = scmp.ne.s32.totalorder %s54, %s55
      %p69 = scmp.eq.s32.totalorder %s33, 1
      %p70 = por %p68, %p69
      %p72 = scmp.ne.s32.totalorder %s55, %s71
      %p73 = scmp.eq.s32.totalorder %s33, 0
      %p74 = por %p72, %p73
      %s76 = sadd.s32 %s75, 1
      %p79 = scmp.eq.s32.totalorder %s27, 1
      %p80 = scmp.ne.s32.totalorder %s75, %s77
      %p81 = scmp.eq.s32.totalorder %s27, 0
      %p82 = por %p80, %p81
      %p83 = scmp.ne.s32.totalorder %s75, %s77
      %p84 = scmp.eq.s32.totalorder %s32, 1
      %p85 = por %p83, %p84
      %p86 = scmp.ne.s32.totalorder %s77, %s78
      %p87 = scmp.eq.s32.totalorder %s32, 0
      %p88 = por %p86, %p87
      %p89 = scmp.ne.s32.totalorder %s77, %s78
      %p90 = scmp.eq.s32.totalorder %s33, 1
      %p91 = por %p89, %p90
      %p93 = scmp.ne.s32.totalorder %s78, %s92
      %p94 = scmp.eq.s32.totalorder %s33, 0
      %p95 = por %p93, %p94
      %s97 = sadd.s32 %s96, 1
      %p100 = scmp.eq.s32.totalorder %s27, 1
      %p101 = scmp.ne.s32.totalorder %s96, %s98
      %p102 = scmp.eq.s32.totalorder %s27, 0
      %p103 = por %p101, %p102
      %p104 = scmp.ne.s32.totalorder %s96, %s98
      %p105 = scmp.eq.s32.totalorder %s32, 1
      %p106 = por %p104, %p105
      %p107 = scmp.ne.s32.totalorder %s98, %s99
      %p108 = scmp.eq.s32.totalorder %s32, 0
      %p109 = por %p107, %p108
      %p110 = scmp.ne.s32.totalorder %s98, %s99
      %p111 = scmp.eq.s32.totalorder %s33, 1
      %p112 = por %p110, %p111
      %p114 = scmp.ne.s32.totalorder %s99, %s113
      %p115 = scmp.eq.s32.totalorder %s33, 0
      %p116 = por %p114, %p115
      %s118 = sadd.s32 %s117, 1
      %p121 = scmp.eq.s32.totalorder %s27, 1
      %p122 = scmp.ne.s32.totalorder %s117, %s119
      %p123 = scmp.eq.s32.totalorder %s27, 0
      %p124 = por %p122, %p123
      %p125 = scmp.ne.s32.totalorder %s117, %s119
      %p126 = scmp.eq.s32.totalorder %s32, 1
      %p127 = por %p125, %p126
      %p128 = scmp.ne.s32.totalorder %s119, %s120
      %p129 = scmp.eq.s32.totalorder %s32, 0
      %p130 = por %p128, %p129
      %p131 = scmp.ne.s32.totalorder %s119, %s120
      %p132 = scmp.eq.s32.totalorder %s33, 1
      %p133 = por %p131, %p132
      %p135 = scmp.ne.s32.totalorder %s120, %s134
      %p136 = scmp.eq.s32.totalorder %s33, 0
      %p137 = por %p135, %p136
      %s139 = sadd.s32 %s138, 1
      %p142 = scmp.eq.s32.totalorder %s27, 1
      %p143 = scmp.ne.s32.totalorder %s138, %s140
      %p144 = scmp.eq.s32.totalorder %s27, 0
      %p145 = por %p143, %p144
      %p146 = scmp.ne.s32.totalorder %s138, %s140
      %p147 = scmp.eq.s32.totalorder %s32, 1
      %p148 = por %p146, %p147
      %p149 = scmp.ne.s32.totalorder %s140, %s141
      %p150 = scmp.eq.s32.totalorder %s32, 0
      %p151 = por %p149, %p150
      %p152 = scmp.ne.s32.totalorder %s140, %s141
      %p153 = scmp.eq.s32.totalorder %s33, 1
      %p154 = por %p152, %p153
      %p156 = scmp.ne.s32.totalorder %s141, %s155
      %p157 = scmp.eq.s32.totalorder %s33, 0
      %p158 = por %p156, %p157
      %s160 = sadd.s32 %s159, 1
      %p163 = scmp.eq.s32.totalorder %s27, 1
      %p164 = scmp.ne.s32.totalorder %s159, %s161
      %p165 = scmp.eq.s32.totalorder %s27, 0
      %p166 = por %p164, %p165
      %p167 = scmp.ne.s32.totalorder %s159, %s161
      %p168 = scmp.eq.s32.totalorder %s32, 1
      %p169 = por %p167, %p168
      %p170 = scmp.ne.s32.totalorder %s161, %s162
      %p171 = scmp.eq.s32.totalorder %s32, 0
      %p172 = por %p170, %p171
      %p173 = scmp.ne.s32.totalorder %s161, %s162
      %p174 = scmp.eq.s32.totalorder %s33, 1
      %p175 = por %p173, %p174
      %p177 = scmp.ne.s32.totalorder %s162, %s176
      %p178 = scmp.eq.s32.totalorder %s33, 0
      %p179 = por %p177, %p178
      %s181 = sadd.s32 %s180, 1
      %p184 = scmp.eq.s32.totalorder %s27, 1
      %p185 = scmp.ne.s32.totalorder %s180, %s182
      %p186 = scmp.eq.s32.totalorder %s27, 0
      %p187 = por %p185, %p186
      %p188 = scmp.ne.s32.totalorder %s180, %s182
      %p189 = scmp.eq.s32.totalorder %s32, 1
      %p190 = por %p188, %p189
      %p191 = scmp.ne.s32.totalorder %s182, %s183
      %p192 = scmp.eq.s32.totalorder %s32, 0
      %p193 = por %p191, %p192
      %p194 = scmp.ne.s32.totalorder %s182, %s183
      %p195 = scmp.eq.s32.totalorder %s33, 1
      %p196 = por %p194, %p195
      %p198 = scmp.ne.s32.totalorder %s183, %s197
      %p199 = scmp.eq.s32.totalorder %s33, 0
      %p200 = por %p198, %p199
      %s201 = ssub.s32 %s34, %s46
      %s202 = ssub.s32 %s35, %s42
      %s203 = sor.u32 %s201, %s202
      %p204 = scmp.eq.s32.totalorder %s203, 0
      %s206 = sadd.s32 %s205, 1
      %s207 = scalar_select %p204, %s205, %s206
      %p210 = pneg %p204
      %p211 = scmp.eq.s32.totalorder %s27, 1
      %p212 = por %p210, %p211
      %p213 = scmp.ne.s32.totalorder %s205, %s208
      %p214 = scmp.eq.s32.totalorder %s27, 0
      %p215 = por %p213, %p214
      %p216 = scmp.ne.s32.totalorder %s205, %s208
      %p217 = scmp.eq.s32.totalorder %s32, 1
      %p218 = por %p216, %p217
      %p219 = scmp.ne.s32.totalorder %s208, %s209
      %p220 = scmp.eq.s32.totalorder %s32, 0
      %p221 = por %p219, %p220
      %p222 = scmp.ne.s32.totalorder %s208, %s209
      %p223 = scmp.eq.s32.totalorder %s33, 1
      %p224 = por %p222, %p223
      %p226 = scmp.ne.s32.totalorder %s209, %s225
      %p227 = scmp.eq.s32.totalorder %s33, 0
      %p228 = por %p226, %p227
      %s229 = ssub.s32 %s34, %s46
      %s230 = ssub.s32 %s35, %s42
      %s231 = sor.u32 %s229, %s230
      %p232 = scmp.eq.s32.totalorder %s231, 0
      %s234 = sadd.s32 %s233, 1
      %s235 = scalar_select %p232, %s233, %s234
      %p238 = pneg %p232
      %p239 = scmp.eq.s32.totalorder %s27, 1
      %p240 = por %p238, %p239
      %p241 = scmp.ne.s32.totalorder %s233, %s236
      %p242 = scmp.eq.s32.totalorder %s27, 0
      %p243 = por %p241, %p242
      %p244 = scmp.ne.s32.totalorder %s233, %s236
      %p245 = scmp.eq.s32.totalorder %s32, 1
      %p246 = por %p244, %p245
      %p247 = scmp.ne.s32.totalorder %s236, %s237
      %p248 = scmp.eq.s32.totalorder %s32, 0
      %p249 = por %p247, %p248
      %p250 = scmp.ne.s32.totalorder %s236, %s237
      %p251 = scmp.eq.s32.totalorder %s33, 1
      %p252 = por %p250, %p251
      %p254 = scmp.ne.s32.totalorder %s237, %s253
      %p255 = scmp.eq.s32.totalorder %s33, 0
      %p256 = por %p254, %p255
      %s257 = ssub.s32 %s34, %s46
      %s258 = ssub.s32 %s35, %s42
      %s259 = sor.u32 %s257, %s258
      %p260 = scmp.eq.s32.totalorder %s259, 0
      %s262 = sadd.s32 %s261, 1
      %s263 = scalar_select %p260, %s261, %s262
      %p266 = pneg %p260
      %p267 = scmp.eq.s32.totalorder %s27, 1
      %p268 = por %p266, %p267
      %p269 = scmp.ne.s32.totalorder %s261, %s264
      %p270 = scmp.eq.s32.totalorder %s27, 0
      %p271 = por %p269, %p270
      %p272 = scmp.ne.s32.totalorder %s261, %s264
      %p273 = scmp.eq.s32.totalorder %s32, 1
      %p274 = por %p272, %p273
      %p275 = scmp.ne.s32.totalorder %s264, %s265
      %p276 = scmp.eq.s32.totalorder %s32, 0
      %p277 = por %p275, %p276
      %p278 = scmp.ne.s32.totalorder %s264, %s265
      %p279 = scmp.eq.s32.totalorder %s33, 1
      %p280 = por %p278, %p279
      %p282 = scmp.ne.s32.totalorder %s265, %s281
      %p283 = scmp.eq.s32.totalorder %s33, 0
      %p284 = por %p282, %p283
      %p285 = scmp.le.s32.totalorder 1, %s27
      %p286 = scmp.lt.s32.totalorder %s27, 3
      %p287 = pnand %p285, %p286
      %p288 = pneg %p287
      // Predicated region
      $region9: #{tpu_custom_call.1} parent=5 // pred_check
        _
      $region10: #{tpu_custom_call.1} parent=5 // pred_check_branch
        %290 = sbr.rel (%p287) target = $region12
      $region11: #{tpu_custom_call.1} parent=5 // pred_region
        %s291 = ssub.s32 %s27, 1
        // Predicated region
        $region13: #{tpu_custom_call.1} parent=11 // pred_check
          %p292 = pneg %p88
        $region14: #{tpu_custom_call.1} parent=11 // pred_check_branch
          %294 = sbr.rel (%p292) target = $region16
        $region15: #{tpu_custom_call.1} parent=11 // pred_region
          %296 = vsyncadd [#allocation6], 0
          %s297 = sshll.u32 %s1, 4
          %s298 = int_to_ptr.hbm [resolvable:$true] %s297
          %s299 = sshll.u32 [#allocation5], 4
          %s300 = int_to_ptr.vmem [resolvable:$true] %s299
          %305 = dma.hbm_to_vmem [thread:$0]  %s298, 512, %s300, [#allocation6], 128, 128, 8
        $region16: #{tpu_custom_call.1} parent=11 // pred_fallthru
          _
        // Predicated region
        $region17: #{tpu_custom_call.1} parent=11 // pred_check
          %p306 = pneg %p109
        $region18: #{tpu_custom_call.1} parent=11 // pred_check_branch
          %308 = sbr.rel (%p306) target = $region20
        $region19: #{tpu_custom_call.1} parent=11 // pred_region
          %310 = vsyncadd [#allocation6], 0
          %s311 = sshll.u32 %s2, 4
          %s312 = int_to_ptr.hbm [resolvable:$true] %s311
          %s313 = sshll.u32 [#allocation7], 4
          %s314 = int_to_ptr.vmem [resolvable:$true] %s313
          %319 = dma.hbm_to_vmem [thread:$0]  %s312, 512, %s314, [#allocation6], 128, 128, 8
        $region20: #{tpu_custom_call.1} parent=11 // pred_fallthru
          _
        // Predicated region
        $region21: #{tpu_custom_call.1} parent=11 // pred_check
          %p320 = pneg %p130
        $region22: #{tpu_custom_call.1} parent=11 // pred_check_branch
          %322 = sbr.rel (%p320) target = $region24
        $region23: #{tpu_custom_call.1} parent=11 // pred_region
          %324 = vsyncadd [#allocation9], 0
          %s325 = sshll.u32 %s3, 4
          %s326 = int_to_ptr.hbm [resolvable:$true] %s325
          %s327 = sshll.u32 [#allocation8], 4
          %s328 = int_to_ptr.vmem [resolvable:$true] %s327
          %333 = dma.hbm_to_vmem [thread:$0]  %s326, 512, %s328, [#allocation9], 128, 128, 8
        $region24: #{tpu_custom_call.1} parent=11 // pred_fallthru
          _
        // Predicated region
        $region25: #{tpu_custom_call.1} parent=11 // pred_check
          %p334 = pneg %p151
        $region26: #{tpu_custom_call.1} parent=11 // pred_check_branch
          %336 = sbr.rel (%p334) target = $region28
        $region27: #{tpu_custom_call.1} parent=11 // pred_region
          _
        $region28: #{tpu_custom_call.1} parent=11 // pred_fallthru
          _
        // Predicated region
        $region29: #{tpu_custom_call.1} parent=11 // pred_check
          %p337 = pneg %p172
        $region30: #{tpu_custom_call.1} parent=11 // pred_check_branch
          %339 = sbr.rel (%p337) target = $region32
        $region31: #{tpu_custom_call.1} parent=11 // pred_region
          _
        $region32: #{tpu_custom_call.1} parent=11 // pred_fallthru
          _
        // Predicated region
        $region33: #{tpu_custom_call.1} parent=11 // pred_check
          %p340 = pneg %p193
        $region34: #{tpu_custom_call.1} parent=11 // pred_check_branch
          %342 = sbr.rel (%p340) target = $region36
        $region35: #{tpu_custom_call.1} parent=11 // pred_region
          _
        $region36: #{tpu_custom_call.1} parent=11 // pred_fallthru
          _
      $region12: #{tpu_custom_call.1} parent=5 // pred_fallthru
        _
      %p343 = scmp.lt.s32.totalorder %s27, 2
      // Predicated region
      $region37: #{tpu_custom_call.1} parent=5 // pred_check
        %p344 = pneg %p343
      $region38: #{tpu_custom_call.1} parent=5 // pred_check_branch
        %346 = sbr.rel (%p344) target = $region40
      $region39: #{tpu_custom_call.1} parent=5 // pred_region
        // Predicated region
        $region41: #{tpu_custom_call.1} parent=39 // pred_check
          %p347 = pneg %p61
        $region42: #{tpu_custom_call.1} parent=39 // pred_check_branch
          %349 = sbr.rel (%p347) target = $region44
        $region43: #{tpu_custom_call.1} parent=39 // pred_region
          %s350 = sand.u32 %s51, 1
          %s351 = scalar_lea.sflag [#allocation3], %s350
          %s352 = sand.u32 %s51, 1
          %s353 = smul.addr %s352, 8
          %s354 = scalar_lea.vmem [#allocation2], %s353
          %356 = vsyncadd %s351, 0
          %s357 = sadd.s32 %s35, %s34
          %s358 = smul.addr %s357, 8
          %s359 = scalar_lea.hbm %s0, %s358
          %s361 = sshll.u32 %s359, 4
          %s362 = int_to_ptr.hbm [resolvable:$true] %s361
          %s363 = sshll.u32 %s354, 4
          %s364 = int_to_ptr.vmem [resolvable:$true] %s363
          %366 = dma.hbm_to_vmem [thread:$0]  %s362, 128, %s364, %s351
        $region44: #{tpu_custom_call.1} parent=39 // pred_fallthru
          _
      $region40: #{tpu_custom_call.1} parent=5 // pred_fallthru
        _
      %p367 = scmp.le.s32.totalorder 1, %s27
      %p368 = scmp.lt.s32.totalorder %s27, 3
      %p369 = pnand %p367, %p368
      %p370 = pneg %p369
      // Predicated region
      $region45: #{tpu_custom_call.1} parent=5 // pred_check
        _
      $region46: #{tpu_custom_call.1} parent=5 // pred_check_branch
        %372 = sbr.rel (%p369) target = $region48
      $region47: #{tpu_custom_call.1} parent=5 // pred_region
        %s373 = ssub.s32 %s27, 1
        %s374 = sand.u32 %s54, 1
        %s375 = scalar_lea.sflag [#allocation3], %s374
        %s376 = sand.u32 %s54, 1
        %s377 = smul.addr %s376, 8
        %s378 = scalar_lea.vmem [#allocation2], %s377
        // Predicated region
        $region49: #{tpu_custom_call.1} parent=47 // pred_check
          %p379 = pneg %p67
        $region50: #{tpu_custom_call.1} parent=47 // pred_check_branch
          %381 = sbr.rel (%p379) target = $region52
        $region51: #{tpu_custom_call.1} parent=47 // pred_region
          %383 = dma.done %s375, 128
        $region52: #{tpu_custom_call.1} parent=47 // pred_fallthru
          _
        // Predicated region
        $region53: #{tpu_custom_call.1} parent=47 // pred_check
          %p384 = pneg %p88
        $region54: #{tpu_custom_call.1} parent=47 // pred_check_branch
          %386 = sbr.rel (%p384) target = $region56
        $region55: #{tpu_custom_call.1} parent=47 // pred_region
          %388 = dma.done [#allocation6], 512
        $region56: #{tpu_custom_call.1} parent=47 // pred_fallthru
          _
        // Predicated region
        $region57: #{tpu_custom_call.1} parent=47 // pred_check
          %p389 = pneg %p109
        $region58: #{tpu_custom_call.1} parent=47 // pred_check_branch
          %391 = sbr.rel (%p389) target = $region60
        $region59: #{tpu_custom_call.1} parent=47 // pred_region
          %393 = dma.done [#allocation6], 512
        $region60: #{tpu_custom_call.1} parent=47 // pred_fallthru
          _
        // Predicated region
        $region61: #{tpu_custom_call.1} parent=47 // pred_check
          %p394 = pneg %p130
        $region62: #{tpu_custom_call.1} parent=47 // pred_check_branch
          %396 = sbr.rel (%p394) target = $region64
        $region63: #{tpu_custom_call.1} parent=47 // pred_region
          %398 = dma.done [#allocation9], 512
        $region64: #{tpu_custom_call.1} parent=47 // pred_fallthru
          _
        %s399 = sand.u32 %s54, 1
        %s400 = scalar_lea.sflag [#allocation3], %s399
        %s401 = sand.u32 %s54, 1
        %s402 = smul.addr %s401, 8
        %s403 = scalar_lea.vmem [#allocation2], %s402
        %p404 = pneg %p67
        %p405 = pneg %p64
        %p406 = pneg %p88
        %p407 = pneg %p85
        %p408 = pneg %p109
        %p409 = pneg %p106
        %p410 = pneg %p130
        %p411 = pneg %p127
        %p412 = pneg %p151
        %p413 = pneg %p148
        %p414 = pneg %p172
        %p415 = pneg %p169
        %p416 = pneg %p193
        %p417 = pneg %p190
        %p418 = pneg %p221
        %p419 = pneg %p218
        %s420 = sand.u32 %s208, 1
        %s421 = scalar_lea.sflag [#allocation4], %s420
        %s422 = sand.u32 %s208, 1
        %s423 = smul.addr %s422, 32
        %s424 = scalar_lea.vmem [#allocation10], %s423
        %p425 = pneg %p249
        %p426 = pneg %p246
        %s427 = sand.u32 %s32, 1
        %s428 = scalar_lea.sflag [#allocation12], %s427
        %s429 = sand.u32 %s236, 1
        %s430 = smul.addr %s429, 32
        %s431 = scalar_lea.vmem [#allocation11], %s430
        %p432 = pneg %p277
        %p433 = pneg %p274
        %s434 = sand.u32 %s32, 1
        %s435 = scalar_lea.sflag [#allocation12], %s434
        %s436 = sand.u32 %s264, 1
        %s437 = smul.addr %s436, 32
        %s438 = scalar_lea.vmem [#allocation13], %s437
        %v439 = vld [vmem:[%s378] sm:$0xff]
        %v440 = vld [vmem:[#allocation5] sm:$0xff]
        %v441 = vld [vmem:[#allocation5 + $0x8] sm:$0xff]
        %v442 = vld [vmem:[#allocation5 + $0x10] sm:$0xff]
        %v443 = vld [vmem:[#allocation5 + $0x18] sm:$0xff]
        %v444 = vld [vmem:[%s4] sm:$0x1]
        %v446 = vperm.slane %v444, 0
        %vm448 = vcmask 261120
        %v450 = vsel %vm448, %v439, 0
        %452 = vmatpush.msra.mxu0 0.0
        %453 = vmatpush.msra.mxu0 0.0
        %454 = vmatpush.msra.mxu0 0.0
        %455 = vmatpush.msra.mxu0 0.0
        %456 = vmatpush.msra.mxu0 0.0
        %457 = vmatpush.msra.mxu0 0.0
        %458 = vmatpush.msra.mxu0 0.0
        %459 = vmatpush.msra.mxu0 0.0
        %460 = vmatpush.msra.mxu0 0.0
        %461 = vmatpush.msra.mxu0 0.0
        %462 = vmatpush.msra.mxu0 0.0
        %463 = vmatpush.msra.mxu0 0.0
        %464 = vmatpush.msra.mxu0 %v443
        %465 = vmatpush.msra.mxu0 %v442
        %466 = vmatpush.msra.mxu0 %v441
        %467 = vmatpush.msra.mxu0 %v440
        %468 = vmatmul.f32.gmra.mxu0 %v450
        %v469 = vpop.f32.mrf.mxu0
        %v470 = vadd.f32 %v446, %v469
        %471 = vdwg.mxu0
        %v472 = vld [vmem:[#allocation7] sm:$0xff]
        %v473 = vld [vmem:[#allocation7 + $0x8] sm:$0xff]
        %v474 = vld [vmem:[#allocation7 + $0x10] sm:$0xff]
        %v475 = vld [vmem:[#allocation7 + $0x18] sm:$0xff]
        %v476 = vld [vmem:[%s5] sm:$0x1]
        %v478 = vperm.slane %v476, 0
        %480 = vmatpush.msra.mxu0 0.0
        %481 = vmatpush.msra.mxu0 0.0
        %482 = vmatpush.msra.mxu0 0.0
        %483 = vmatpush.msra.mxu0 0.0
        %484 = vmatpush.msra.mxu0 0.0
        %485 = vmatpush.msra.mxu0 0.0
        %486 = vmatpush.msra.mxu0 0.0
        %487 = vmatpush.msra.mxu0 0.0
        %488 = vmatpush.msra.mxu0 0.0
        %489 = vmatpush.msra.mxu0 0.0
        %490 = vmatpush.msra.mxu0 0.0
        %491 = vmatpush.msra.mxu0 0.0
        %492 = vmatpush.msra.mxu0 %v475
        %493 = vmatpush.msra.mxu0 %v474
        %494 = vmatpush.msra.mxu0 %v473
        %495 = vmatpush.msra.mxu0 %v472
        %496 = vmatmul.f32.gmra.mxu0 %v450
        %v497 = vpop.f32.mrf.mxu0
        %v498 = vadd.f32 %v478, %v497
        %499 = vdwg.mxu0
        %v500 = vld [vmem:[#allocation8] sm:$0xff]
        %v501 = vld [vmem:[#allocation8 + $0x8] sm:$0xff]
        %v502 = vld [vmem:[#allocation8 + $0x10] sm:$0xff]
        %v503 = vld [vmem:[#allocation8 + $0x18] sm:$0xff]
        %v504 = vld [vmem:[%s6] sm:$0x1]
        %v506 = vperm.slane %v504, 0
        %508 = vmatpush.msra.mxu0 0.0
        %509 = vmatpush.msra.mxu0 0.0
        %510 = vmatpush.msra.mxu0 0.0
        %511 = vmatpush.msra.mxu0 0.0
        %512 = vmatpush.msra.mxu0 0.0
        %513 = vmatpush.msra.mxu0 0.0
        %514 = vmatpush.msra.mxu0 0.0
        %515 = vmatpush.msra.mxu0 0.0
        %516 = vmatpush.msra.mxu0 0.0
        %517 = vmatpush.msra.mxu0 0.0
        %518 = vmatpush.msra.mxu0 0.0
        %519 = vmatpush.msra.mxu0 0.0
        %520 = vmatpush.msra.mxu0 %v503
        %521 = vmatpush.msra.mxu0 %v502
        %522 = vmatpush.msra.mxu0 %v501
        %523 = vmatpush.msra.mxu0 %v500
        %524 = vmatmul.f32.gmra.mxu0 %v450
        %v525 = vpop.f32.mrf.mxu0
        %v526 = vadd.f32 %v506, %v525
        %527 = vdwg.mxu0
        %v528 = vmul.f32 %v470, 0.35355338
        %vm529 = vcmask 64512
        %530 = vst.msk [vmem:[%s424] sm:$0xff] %vm529, %v528
        %531 = vst.msk [vmem:[%s431] sm:$0xff] %vm529, %v498
        %532 = vst.msk [vmem:[%s438] sm:$0xff] %vm529, %v526
        %534 = vrot.lane.b32.xlu0 %v528, 120
        %v535 = vpop.permute.xlu0 %534
        %s537 = scalar_lea.vmem %s424, 8 [#allocation10]
        %538 = vst.msk [vmem:[%s537] sm:$0xff] %vm529, %v535
        %540 = vrot.lane.b32.xlu0 %v498, 120
        %v541 = vpop.permute.xlu0 %540
        %s543 = scalar_lea.vmem %s431, 8 [#allocation11]
        %544 = vst.msk [vmem:[%s543] sm:$0xff] %vm529, %v541
        %546 = vrot.lane.b32.xlu0 %v526, 120
        %v547 = vpop.permute.xlu0 %546
        %s549 = scalar_lea.vmem %s438, 8 [#allocation13]
        %550 = vst.msk [vmem:[%s549] sm:$0xff] %vm529, %v547
        %551 = vrot.lane.b32.xlu0 %v528, 112
        %v552 = vpop.permute.xlu0 %551
        %s554 = scalar_lea.vmem %s424, 16 [#allocation10]
        %555 = vst.msk [vmem:[%s554] sm:$0xff] %vm529, %v552
        %556 = vrot.lane.b32.xlu0 %v498, 112
        %v557 = vpop.permute.xlu0 %556
        %s559 = scalar_lea.vmem %s431, 16 [#allocation11]
        %560 = vst.msk [vmem:[%s559] sm:$0xff] %vm529, %v557
        %561 = vrot.lane.b32.xlu0 %v526, 112
        %v562 = vpop.permute.xlu0 %561
        %s564 = scalar_lea.vmem %s438, 16 [#allocation13]
        %565 = vst.msk [vmem:[%s564] sm:$0xff] %vm529, %v562
        %566 = vrot.lane.b32.xlu0 %v528, 104
        %v567 = vpop.permute.xlu0 %566
        %s569 = scalar_lea.vmem %s424, 24 [#allocation10]
        %570 = vst.msk [vmem:[%s569] sm:$0xff] %vm529, %v567
        %571 = vrot.lane.b32.xlu0 %v498, 104
        %v572 = vpop.permute.xlu0 %571
        %s574 = scalar_lea.vmem %s431, 24 [#allocation11]
        %575 = vst.msk [vmem:[%s574] sm:$0xff] %vm529, %v572
        %576 = vrot.lane.b32.xlu0 %v526, 104
        %v577 = vpop.permute.xlu0 %576
        %s579 = scalar_lea.vmem %s438, 24 [#allocation13]
        %580 = vst.msk [vmem:[%s579] sm:$0xff] %vm529, %v577
        %s581 = sand.u32 %s208, 1
        %s582 = scalar_lea.sflag [#allocation4], %s581
        %s583 = sand.u32 %s208, 1
        %s584 = smul.addr %s583, 32
        %s585 = scalar_lea.vmem [#allocation10], %s584
        %s586 = sand.u32 %s32, 1
        %s587 = scalar_lea.sflag [#allocation12], %s586
        %s588 = sand.u32 %s236, 1
        %s589 = smul.addr %s588, 32
        %s590 = scalar_lea.vmem [#allocation11], %s589
        %s591 = sand.u32 %s32, 1
        %s592 = scalar_lea.sflag [#allocation12], %s591
        %s593 = sand.u32 %s264, 1
        %s594 = smul.addr %s593, 32
        %s595 = scalar_lea.vmem [#allocation13], %s594
        // Predicated region
        $region65: #{tpu_custom_call.1} parent=47 // pred_check
          %p596 = pneg %p218
        $region66: #{tpu_custom_call.1} parent=47 // pred_check_branch
          %598 = sbr.rel (%p596) target = $region68
        $region67: #{tpu_custom_call.1} parent=47 // pred_region
          %600 = vsyncadd %s582, 0
          %s601 = smul.addr %s36, 4
          %s602 = sadd.s32 %s37, %s601
          %s603 = smul.addr %s602, 8
          %s604 = scalar_lea.hbm %s7, %s603
          %s605 = sshll.u32 %s585, 4
          %s606 = int_to_ptr.vmem [resolvable:$true] %s605
          %s607 = sshll.u32 %s604, 4
          %s608 = int_to_ptr.hbm [resolvable:$true] %s607
          %613 = dma.vmem_to_hbm [thread:$0]  %s606, 512, %s608, %s582, 128, 128, 8
        $region68: #{tpu_custom_call.1} parent=47 // pred_fallthru
          _
        // Predicated region
        $region69: #{tpu_custom_call.1} parent=47 // pred_check
          %p614 = pneg %p246
        $region70: #{tpu_custom_call.1} parent=47 // pred_check_branch
          %616 = sbr.rel (%p614) target = $region72
        $region71: #{tpu_custom_call.1} parent=47 // pred_region
          %618 = vsyncadd %s587, 0
          %s619 = smul.addr %s36, 4
          %s620 = sadd.s32 %s37, %s619
          %s621 = smul.addr %s620, 8
          %s622 = scalar_lea.hbm %s8, %s621
          %s623 = sshll.u32 %s590, 4
          %s624 = int_to_ptr.vmem [resolvable:$true] %s623
          %s625 = sshll.u32 %s622, 4
          %s626 = int_to_ptr.hbm [resolvable:$true] %s625
          %631 = dma.vmem_to_hbm [thread:$0]  %s624, 512, %s626, %s587, 128, 128, 8
        $region72: #{tpu_custom_call.1} parent=47 // pred_fallthru
          _
        // Predicated region
        $region73: #{tpu_custom_call.1} parent=47 // pred_check
          %p632 = pneg %p274
        $region74: #{tpu_custom_call.1} parent=47 // pred_check_branch
          %634 = sbr.rel (%p632) target = $region76
        $region75: #{tpu_custom_call.1} parent=47 // pred_region
          %636 = vsyncadd %s592, 0
          %s637 = smul.addr %s36, 4
          %s638 = sadd.s32 %s37, %s637
          %s639 = smul.addr %s638, 8
          %s640 = scalar_lea.hbm %s9, %s639
          %s641 = sshll.u32 %s595, 4
          %s642 = int_to_ptr.vmem [resolvable:$true] %s641
          %s643 = sshll.u32 %s640, 4
          %s644 = int_to_ptr.hbm [resolvable:$true] %s643
          %649 = dma.vmem_to_hbm [thread:$0]  %s642, 512, %s644, %s592, 128, 128, 8
        $region76: #{tpu_custom_call.1} parent=47 // pred_fallthru
          _
      $region48: #{tpu_custom_call.1} parent=5 // pred_fallthru
        _
      %p650 = scmp.le.s32.totalorder 2, %s27
      // Predicated region
      $region77: #{tpu_custom_call.1} parent=5 // pred_check
        %p651 = pneg %p650
      $region78: #{tpu_custom_call.1} parent=5 // pred_check_branch
        %653 = sbr.rel (%p651) target = $region80
      $region79: #{tpu_custom_call.1} parent=5 // pred_region
        %s654 = ssub.s32 %s27, 2
        // Predicated region
        $region81: #{tpu_custom_call.1} parent=79 // pred_check
          %p655 = pneg %p224
        $region82: #{tpu_custom_call.1} parent=79 // pred_check_branch
          %657 = sbr.rel (%p655) target = $region84
        $region83: #{tpu_custom_call.1} parent=79 // pred_region
          %s658 = sand.u32 %s209, 1
          %s659 = scalar_lea.sflag [#allocation4], %s658
          %s660 = sand.u32 %s209, 1
          %s661 = smul.addr %s660, 32
          %s662 = scalar_lea.vmem [#allocation10], %s661
          %664 = dma.done %s659, 512
        $region84: #{tpu_custom_call.1} parent=79 // pred_fallthru
          _
        // Predicated region
        $region85: #{tpu_custom_call.1} parent=79 // pred_check
          %p665 = pneg %p252
        $region86: #{tpu_custom_call.1} parent=79 // pred_check_branch
          %667 = sbr.rel (%p665) target = $region88
        $region87: #{tpu_custom_call.1} parent=79 // pred_region
          %s668 = sand.u32 %s33, 1
          %s669 = scalar_lea.sflag [#allocation12], %s668
          %s670 = sand.u32 %s237, 1
          %s671 = smul.addr %s670, 32
          %s672 = scalar_lea.vmem [#allocation11], %s671
          %674 = dma.done %s669, 512
        $region88: #{tpu_custom_call.1} parent=79 // pred_fallthru
          _
        // Predicated region
        $region89: #{tpu_custom_call.1} parent=79 // pred_check
          %p675 = pneg %p280
        $region90: #{tpu_custom_call.1} parent=79 // pred_check_branch
          %677 = sbr.rel (%p675) target = $region92
        $region91: #{tpu_custom_call.1} parent=79 // pred_region
          %s678 = sand.u32 %s33, 1
          %s679 = scalar_lea.sflag [#allocation12], %s678
          %s680 = sand.u32 %s265, 1
          %s681 = smul.addr %s680, 32
          %s682 = scalar_lea.vmem [#allocation13], %s681
          %684 = dma.done %s679, 512
        $region92: #{tpu_custom_call.1} parent=79 // pred_fallthru
          _
      $region80: #{tpu_custom_call.1} parent=5 // pred_fallthru
        _
    $region6: #{tpu_custom_call.1} parent=1 // loop_footer
      %s31 = sadd.s32 1, %s27
    $region7: #{tpu_custom_call.1} parent=1 // loop_footer_branch
      %26 = sbr.rel target = $region3
    $region8: #{tpu_custom_call.1} parent=1 // loop_exit
      _
    %685 = vsyncpa [#allocation3], 1
    %s686 = scalar_lea.sflag [#allocation3], 1
    %687 = vsyncpa %s686, 1
    %688 = vsyncpa [#allocation6], 1
    %689 = vsyncpa [#allocation9], 1
    %690 = vsyncpa [#allocation4], 1
    %s691 = scalar_lea.sflag [#allocation4], 1
    %692 = vsyncpa %s691, 1
    %693 = vsyncpa [#allocation12], 1
    %s694 = scalar_lea.sflag [#allocation12], 1
    %695 = vsyncpa %s694, 1

</llo_original>
